<compile_context>
chip_gen: v7x
topology: tpu7x:2x2x1
jax: 0.10.0
libtpu: 0.0.40
codegen_flags: <defaults>
</compile_context>

<pallas_src>
import jax
import jax.numpy as jnp
from jax.experimental import pallas as pl
from jax.experimental.pallas import tpu as pltpu

LANE = 128            # lane width (last dim)
MAX_SINGLE_TILE = 2048


def _round_up(n, m):
    return ((n + m - 1) // m) * m


def _pad2d(a, rows, cols):
    return jnp.pad(a, ((0, rows - a.shape[0]), (0, cols - a.shape[1])))


def dqn_mlp_kernel(x_ref, w0_ref, wr_ref, b_ref, q_ref):
    # x: (tile_b, state_dim) f32 (unpadded lanes); w0: (state_dim, P) bf16;
    # wr: (3, P, P) bf16 (layers 1, 2, q); b: (4, 1, P) f32; q: (tile_b, P) f32.
    xb = x_ref[...].astype(jnp.bfloat16)
    a = jnp.dot(xb, w0_ref[...], preferred_element_type=jnp.float32) + b_ref[0]
    h = jnp.maximum(a, 0.0).astype(jnp.bfloat16)       # ReLU in f32, bf16 for next MXU pass
    for l in range(2):                                  # layers 1 and 2 (trace-time unrolled)
        a = jnp.dot(h, wr_ref[l], preferred_element_type=jnp.float32) + b_ref[l + 1]
        h = jnp.maximum(a, 0.0).astype(jnp.bfloat16)
    # Q head: no ReLU.
    q_ref[...] = jnp.dot(h, wr_ref[2], preferred_element_type=jnp.float32) + b_ref[3]


def prepare_params(params):
    """One-time packing: w0 bf16 (state_dim, P); stacked w_rest bf16 (3, P, P);
    stacked biases f32 (4, 1, P). P = hidden/action padded to 128 lanes."""
    S, H = params["w0"].shape
    A = params["wq"].shape[1]
    P = _round_up(max(H, A), LANE)
    w0 = _pad2d(params["w0"], S, P).astype(jnp.bfloat16)
    w_rest = jnp.stack([_pad2d(params["w1"], P, P),
                        _pad2d(params["w2"], P, P),
                        _pad2d(params["wq"], P, P)]).astype(jnp.bfloat16)
    b_all = jnp.stack([_pad2d(params[f"b{n}"].reshape(1, -1), 1, P)
                       for n in ("0", "1", "2", "q")]).astype(jnp.float32)
    return dict(w0=w0, w_rest=w_rest, b_all=b_all,
                state_dim=S, pad_width=P, action_dim=A)


def _num_tensorcores():
    try:
        kind = jax.devices()[0].device_kind
    except Exception:
        return 1
    return 2 if "7" in kind else 1   # v7x exposes 2 TensorCores per chip


def _pick_tile_b(B):
    ntc = _num_tensorcores()
    if ntc >= 2 and B >= 64:
        # Exactly one block per TensorCore; parallel grid axis shards across TCs.
        return _round_up(pl.cdiv(B, ntc), 16)
    if B <= MAX_SINGLE_TILE:
        return B                     # single grid step; block == full array, no padding
    return 1024                      # huge replay batches: 1024-row tiles (ragged tail OK)


def dqn_forward(x, prep):
    """x: (B, state_dim) f32, unpadded/uncast.

    Returns the padded (B, P) f32 Q block; real Q values are [:, :action_dim].
    Slice (or argmax) lazily at the consumer to avoid an extra XLA copy per call.
    """
    B, S = x.shape
    assert S == prep["state_dim"]
    P = prep["pad_width"]
    tile_b = _pick_tile_b(B)
    grid = (pl.cdiv(B, tile_b),)

    cost = pl.CostEstimate(
        flops=int(2 * B * (S * P + 3 * P * P)),
        transcendentals=0,
        bytes_accessed=int(B * S * 4 + prep["w0"].size * 2
                           + prep["w_rest"].size * 2 + prep["b_all"].size * 4
                           + B * P * 4),
    )

    return pl.pallas_call(
        dqn_mlp_kernel,
        out_shape=jax.ShapeDtypeStruct((B, P), jnp.float32),
        grid=grid,
        in_specs=[
            pl.BlockSpec((tile_b, S), lambda i: (i, 0)),          # x: tiled over batch
            pl.BlockSpec(prep["w0"].shape, lambda i: (0, 0)),     # weights stay VMEM-resident
            pl.BlockSpec(prep["w_rest"].shape, lambda i: (0, 0, 0)),
            pl.BlockSpec(prep["b_all"].shape, lambda i: (0, 0, 0)),
        ],
        out_specs=pl.BlockSpec((tile_b, P), lambda i: (i, 0)),
        compiler_params=pltpu.CompilerParams(
            dimension_semantics=("parallel",)),
        cost_estimate=cost,
    )(x, prep["w0"], prep["w_rest"], prep["b_all"])


def init_params(key, state_input_dim, hidden_size, action_dim):
    """Deterministic PyTorch-Linear-like uniform init; weights stored (in, out), f32."""
    dims = [(state_input_dim, hidden_size),
            (hidden_size, hidden_size),
            (hidden_size, hidden_size),
            (hidden_size, action_dim)]
    names = ["0", "1", "2", "q"]
    params = {}
    for (fan_in, fan_out), name in zip(dims, names):
        key, kw, kb = jax.random.split(key, 3)
        bound = 1.0 / (fan_in ** 0.5)
        params[f"w{name}"] = jax.random.uniform(
            kw, (fan_in, fan_out), jnp.float32, -bound, bound)
        params[f"b{name}"] = jax.random.uniform(
            kb, (1, fan_out), jnp.float32, -bound, bound)
    return params


def reference_forward(x, params):
    """Pure-JAX reference with the same bf16-input / f32-accum precision as the kernel."""
    def lin(h, w, b):
        return jnp.dot(h.astype(jnp.bfloat16), w.astype(jnp.bfloat16),
                       preferred_element_type=jnp.float32) + b
    h = jnp.maximum(lin(x, params["w0"], params["b0"]), 0.0)
    h = jnp.maximum(lin(h, params["w1"], params["b1"]), 0.0)
    h = jnp.maximum(lin(h, params["w2"], params["b2"]), 0.0)
    return lin(h, params["wq"], params["bq"])


if __name__ == "__main__":
    # CartPole-like dims: state_input_dim=4, hidden_size=32, action_dim=2.
    state_input_dim, hidden_size, action_dim = 4, 32, 2

    key = jax.random.PRNGKey(0)
    key, kx1, kx2 = jax.random.split(key, 3)
    params = init_params(key, state_input_dim, hidden_size, action_dim)
    prep = prepare_params(params)

    # Small per-step batch (single grid step).
    x_small = jax.random.normal(kx1, (8, state_input_dim), dtype=jnp.float32)
    q_small_pad = jax.block_until_ready(dqn_forward(x_small, prep))
    q_small = q_small_pad[:, :action_dim]        # lazy consumer-side slice
    assert q_small.shape == (8, action_dim)
    assert jnp.allclose(q_small, reference_forward(x_small, params),
                        atol=1e-4, rtol=1e-4), "small-batch mismatch vs reference"

    # Larger (replay-style) batch; on v7x this splits into 2 parallel TC shards.
    x_big = jax.random.normal(kx2, (512, state_input_dim), dtype=jnp.float32)
    q_big_pad = jax.block_until_ready(dqn_forward(x_big, prep))
    q_big = q_big_pad[:, :action_dim]
    assert q_big.shape == (512, action_dim)
    assert jnp.allclose(q_big, reference_forward(x_big, params),
                        atol=1e-4, rtol=1e-4), "big-batch mismatch vs reference"

    # TODO(synk): env rollout / redis replay buffer / epsilon-greedy select_action are
    # host-side control logic, not tensor ops, and are intentionally not kernelized.
    print("KERNEL_OK")
</pallas_src>

<mosaic_0001>
module attributes {stable_mosaic.version = 11 : i64} {
  func.func @dqn_mlp_kernel(%arg0: i32, %arg1: memref<8x4xf32, #tpu.memory_space<vmem>>, %arg2: memref<4x128xbf16, #tpu.memory_space<vmem>>, %arg3: memref<3x128x128xbf16, #tpu.memory_space<vmem>>, %arg4: memref<4x1x128xf32, #tpu.memory_space<vmem>>, %arg5: memref<8x128xf32, #tpu.memory_space<vmem>>) attributes {dimension_semantics = [#tpu.dimension_semantics<parallel>], iteration_bounds = array<i64: 1>, scalar_prefetch = 0 : i64, scratch_operands = 0 : i64, tpu.core_type = #tpu.core_type<tc>, window_params = [{transform_indices = @transform_0, window_bounds = array<i64: 8, 4>}, {pipeline_mode = #tpu.pipeline_mode<synchronous>, transform_indices = @transform_1, window_bounds = array<i64: 4, 128>}, {pipeline_mode = #tpu.pipeline_mode<synchronous>, transform_indices = @transform_2, window_bounds = array<i64: 3, 128, 128>}, {pipeline_mode = #tpu.pipeline_mode<synchronous>, transform_indices = @transform_3, window_bounds = array<i64: 4, 1, 128>}, {transform_indices = @transform_4, window_bounds = array<i64: 8, 128>}]} {
    %c0 = arith.constant 0 : index
    %c0_0 = arith.constant 0 : index
    %0 = vector.load %arg1[%c0, %c0_0] : memref<8x4xf32, #tpu.memory_space<vmem>>, vector<8x4xf32>
    %1 = arith.truncf %0 : vector<8x4xf32> to vector<8x4xbf16>
    %c0_1 = arith.constant 0 : index
    %c0_2 = arith.constant 0 : index
    %2 = vector.load %arg2[%c0_1, %c0_2] : memref<4x128xbf16, #tpu.memory_space<vmem>>, vector<4x128xbf16>
    %cst = arith.constant dense<0.000000e+00> : vector<8x128xf32>
    %3 = tpu.matmul %1, %2, %cst {dimension_numbers = #tpu.dot_dimension_numbers<[1], [0], [0], [1], [0, 0, 1, 1], [], []>} : vector<8x4xbf16>, vector<4x128xbf16>, vector<8x128xf32> -> vector<8x128xf32>
    %c0_3 = arith.constant 0 : index
    %c0_4 = arith.constant 0 : index
    %c0_5 = arith.constant 0 : index
    %4 = vector.load %arg4[%c0_3, %c0_4, %c0_5] : memref<4x1x128xf32, #tpu.memory_space<vmem>>, vector<1x1x128xf32>
    %5 = vector.shape_cast %4 : vector<1x1x128xf32> to vector<1x128xf32>
    %6 = vector.broadcast %5 : vector<1x128xf32> to vector<8x128xf32>
    %7 = arith.addf %3, %6 : vector<8x128xf32>
    %cst_6 = arith.constant 0.000000e+00 : f32
    %8 = vector.broadcast %cst_6 : f32 to vector<8x128xf32>
    %9 = arith.maximumf %7, %8 : vector<8x128xf32>
    %10 = arith.truncf %9 : vector<8x128xf32> to vector<8x128xbf16>
    %c0_7 = arith.constant 0 : index
    %c0_8 = arith.constant 0 : index
    %c0_9 = arith.constant 0 : index
    %11 = vector.load %arg3[%c0_7, %c0_8, %c0_9] : memref<3x128x128xbf16, #tpu.memory_space<vmem>>, vector<1x128x128xbf16>
    %12 = vector.shape_cast %11 : vector<1x128x128xbf16> to vector<128x128xbf16>
    %cst_10 = arith.constant dense<0.000000e+00> : vector<8x128xf32>
    %13 = tpu.matmul %10, %12, %cst_10 {dimension_numbers = #tpu.dot_dimension_numbers<[1], [0], [0], [1], [0, 0, 1, 1], [], []>} : vector<8x128xbf16>, vector<128x128xbf16>, vector<8x128xf32> -> vector<8x128xf32>
    %c1 = arith.constant 1 : index
    %c0_11 = arith.constant 0 : index
    %c0_12 = arith.constant 0 : index
    %14 = vector.load %arg4[%c1, %c0_11, %c0_12] : memref<4x1x128xf32, #tpu.memory_space<vmem>>, vector<1x1x128xf32>
    %15 = vector.shape_cast %14 : vector<1x1x128xf32> to vector<1x128xf32>
    %16 = vector.broadcast %15 : vector<1x128xf32> to vector<8x128xf32>
    %17 = arith.addf %13, %16 : vector<8x128xf32>
    %cst_13 = arith.constant 0.000000e+00 : f32
    %18 = vector.broadcast %cst_13 : f32 to vector<8x128xf32>
    %19 = arith.maximumf %17, %18 : vector<8x128xf32>
    %20 = arith.truncf %19 : vector<8x128xf32> to vector<8x128xbf16>
    %c1_14 = arith.constant 1 : index
    %c0_15 = arith.constant 0 : index
    %c0_16 = arith.constant 0 : index
    %21 = vector.load %arg3[%c1_14, %c0_15, %c0_16] : memref<3x128x128xbf16, #tpu.memory_space<vmem>>, vector<1x128x128xbf16>
    %22 = vector.shape_cast %21 : vector<1x128x128xbf16> to vector<128x128xbf16>
    %cst_17 = arith.constant dense<0.000000e+00> : vector<8x128xf32>
    %23 = tpu.matmul %20, %22, %cst_17 {dimension_numbers = #tpu.dot_dimension_numbers<[1], [0], [0], [1], [0, 0, 1, 1], [], []>} : vector<8x128xbf16>, vector<128x128xbf16>, vector<8x128xf32> -> vector<8x128xf32>
    %c2 = arith.constant 2 : index
    %c0_18 = arith.constant 0 : index
    %c0_19 = arith.constant 0 : index
    %24 = vector.load %arg4[%c2, %c0_18, %c0_19] : memref<4x1x128xf32, #tpu.memory_space<vmem>>, vector<1x1x128xf32>
    %25 = vector.shape_cast %24 : vector<1x1x128xf32> to vector<1x128xf32>
    %26 = vector.broadcast %25 : vector<1x128xf32> to vector<8x128xf32>
    %27 = arith.addf %23, %26 : vector<8x128xf32>
    %cst_20 = arith.constant 0.000000e+00 : f32
    %28 = vector.broadcast %cst_20 : f32 to vector<8x128xf32>
    %29 = arith.maximumf %27, %28 : vector<8x128xf32>
    %30 = arith.truncf %29 : vector<8x128xf32> to vector<8x128xbf16>
    %c2_21 = arith.constant 2 : index
    %c0_22 = arith.constant 0 : index
    %c0_23 = arith.constant 0 : index
    %31 = vector.load %arg3[%c2_21, %c0_22, %c0_23] : memref<3x128x128xbf16, #tpu.memory_space<vmem>>, vector<1x128x128xbf16>
    %32 = vector.shape_cast %31 : vector<1x128x128xbf16> to vector<128x128xbf16>
    %cst_24 = arith.constant dense<0.000000e+00> : vector<8x128xf32>
    %33 = tpu.matmul %30, %32, %cst_24 {dimension_numbers = #tpu.dot_dimension_numbers<[1], [0], [0], [1], [0, 0, 1, 1], [], []>} : vector<8x128xbf16>, vector<128x128xbf16>, vector<8x128xf32> -> vector<8x128xf32>
    %c3 = arith.constant 3 : index
    %c0_25 = arith.constant 0 : index
    %c0_26 = arith.constant 0 : index
    %34 = vector.load %arg4[%c3, %c0_25, %c0_26] : memref<4x1x128xf32, #tpu.memory_space<vmem>>, vector<1x1x128xf32>
    %35 = vector.shape_cast %34 : vector<1x1x128xf32> to vector<1x128xf32>
    %36 = vector.broadcast %35 : vector<1x128xf32> to vector<8x128xf32>
    %37 = arith.addf %33, %36 : vector<8x128xf32>
    %c0_27 = arith.constant 0 : index
    %c0_28 = arith.constant 0 : index
    %38 = vector.load %arg5[%c0_27, %c0_28] : memref<8x128xf32, #tpu.memory_space<vmem>>, vector<8x128xf32>
    tpu.vector_store %arg5[%c0_27, %c0_28], %37 {strides = array<i32>} : memref<8x128xf32, #tpu.memory_space<vmem>>, vector<8x128xf32>,
    return
  }
  func.func @transform_0(%arg0: i32) -> (i32, i32) {
    %c0_i32 = arith.constant 0 : i32
    %c0_i32_0 = arith.constant 0 : i32
    return %arg0, %c0_i32 : i32, i32
  }
  func.func @transform_1(%arg0: i32) -> (i32, i32) {
    %c0_i32 = arith.constant 0 : i32
    %c0_i32_0 = arith.constant 0 : i32
    %c0_i32_1 = arith.constant 0 : i32
    return %c0_i32, %c0_i32_0 : i32, i32
  }
  func.func @transform_2(%arg0: i32) -> (i32, i32, i32) {
    %c0_i32 = arith.constant 0 : i32
    %c0_i32_0 = arith.constant 0 : i32
    %c0_i32_1 = arith.constant 0 : i32
    %c0_i32_2 = arith.constant 0 : i32
    return %c0_i32, %c0_i32_0, %c0_i32_1 : i32, i32, i32
  }
  func.func @transform_3(%arg0: i32) -> (i32, i32, i32) {
    %c0_i32 = arith.constant 0 : i32
    %c0_i32_0 = arith.constant 0 : i32
    %c0_i32_1 = arith.constant 0 : i32
    %c0_i32_2 = arith.constant 0 : i32
    return %c0_i32, %c0_i32_0, %c0_i32_1 : i32, i32, i32
  }
  func.func @transform_4(%arg0: i32) -> (i32, i32) {
    %c0_i32 = arith.constant 0 : i32
    %c0_i32_0 = arith.constant 0 : i32
    return %arg0, %c0_i32 : i32, i32
  }
}

</mosaic_0001>

<llo_original>
// kernel: tpu_custom_call.1
$region0: #{tpu_custom_call.1}
  #allocation0 [shape = 'u32[]', space=smem, size = 0x4, offset = 0x4, fixed_abs, tag = 'smem constant byte address 0x4 - core index']
  #allocation1 [shape = 'u32[144,128]{1,0:T(1,128)}', space=vmem, size = 0x12000, scoped, tag = 'internal scratch']
  %s0 = inlined_call_operand.vmem [shape: f32[8,4], index: 0, kind: input, shape index: {}]
  %s1 = inlined_call_operand.vmem [shape: bf16[4,128], index: 1, kind: input, shape index: {}]
  %s2 = inlined_call_operand.hbm [shape: bf16[3,128,128], index: 2, kind: input, shape index: {}]
  %s3 = inlined_call_operand.vmem [shape: f32[4,1,128], index: 3, kind: input, shape index: {}]
  %s4 = inlined_call_operand.hbm [shape: f32[8,128], index: 4, kind: output, shape index: {}]
  %s5 = sld [smem:[#allocation0]]
  $region30: #{tpu_custom_call.1} parent=0
    _
  %s7 = ssub.s32 1, %s5
  %s8 = scalar_select 0, %s7, %s5
  $region1: #{tpu_custom_call.1} parent=0
    #allocation2 [shape = 'u8[98304]{0}', space=vmem, size = 0x18000, scoped, tag = 'input window, operand 2, single buffered']
    #allocation3 [shape = 's32[1]{0}', space=sflag, size = 0x4, scoped, tag = 'scoped memory for tpu_custom_call.1']
    #allocation4 [shape = 's32[1]{0}', space=sflag, size = 0x4, scoped, tag = 'scoped memory for tpu_custom_call.1']
    #allocation5 [shape = 'u8[4096]{0}', space=vmem, size = 0x1000, scoped, tag = 'output window, operand 0, single buffered']
    %9 = vsyncpa [#allocation3], 0
    %10 = vsyncpa [#allocation4], 0
    // Predicated region
    $region2: #{tpu_custom_call.1} parent=1 // pred_check
      _
    $region3: #{tpu_custom_call.1} parent=1 // pred_check_branch
      %12 = sbr.rel (0) target = $region5
    $region4: #{tpu_custom_call.1} parent=1 // pred_region
      _
    $region5: #{tpu_custom_call.1} parent=1 // pred_fallthru
      _
    // Predicated region
    $region6: #{tpu_custom_call.1} parent=1 // pred_check
      _
    $region7: #{tpu_custom_call.1} parent=1 // pred_check_branch
      %14 = sbr.rel (0) target = $region9
    $region8: #{tpu_custom_call.1} parent=1 // pred_region
      _
    $region9: #{tpu_custom_call.1} parent=1 // pred_fallthru
      _
    // Predicated region
    $region10: #{tpu_custom_call.1} parent=1 // pred_check
      _
    $region11: #{tpu_custom_call.1} parent=1 // pred_check_branch
      %16 = sbr.rel (0) target = $region13
    $region12: #{tpu_custom_call.1} parent=1 // pred_region
      %s18 = ssub.s32 3072, 3072
      %19 = vsyncadd [#allocation3], %s18
      %s20 = sshll.u32 [#allocation2], 4
      %s21 = int_to_ptr.vmem [resolvable:$true] %s20
      %26 = dma.hbm_to_vmem [thread:$0]  %s2, 3072, %s21, [#allocation3], 64, 64, 4
    $region13: #{tpu_custom_call.1} parent=1 // pred_fallthru
      _
    // Predicated region
    $region14: #{tpu_custom_call.1} parent=1 // pred_check
      _
    $region15: #{tpu_custom_call.1} parent=1 // pred_check_branch
      %28 = sbr.rel (0) target = $region17
    $region16: #{tpu_custom_call.1} parent=1 // pred_region
      _
    $region17: #{tpu_custom_call.1} parent=1 // pred_fallthru
      _
    // Predicated region
    $region18: #{tpu_custom_call.1} parent=1 // pred_check
      _
    $region19: #{tpu_custom_call.1} parent=1 // pred_check_branch
      %30 = sbr.rel (0) target = $region21
    $region20: #{tpu_custom_call.1} parent=1 // pred_region
      %31 = dma.done [#allocation3], 3072
    $region21: #{tpu_custom_call.1} parent=1 // pred_fallthru
      _
    %v33 = vld [vmem:[%s0] sm:$0xff]
    %v34 = vpack.c.bf16 %v33, %v33
    %v35 = vld [vmem:[%s1] sm:$0x3]
    %v36 = vld [vmem:[%s3] sm:$0x1]
    %v38 = vlaneseq
    %v39 = vshrl.u32 %v38, 7
    %v40 = vsub.s32 0, %v39
    %v41 = vrot.slane %v36, %v40
    %vm43 = vcmask 31744
    %v45 = vsel %vm43, %v34, 0
    %vm47 = vcmask 1041408
    %v49 = vsel %vm47, %v35, 0
    %51 = vmatprep.subr.bf16.mxu0 0
    %52 = vmatpush1.bf16.msra.mxu0 %v49
    %53 = vmatprep.subr.bf16.mxu0 0
    %54 = vmatpush1.bf16.msra.mxu0 0
    %55 = vmatprep.subr.bf16.mxu0 0
    %56 = vmatpush1.bf16.msra.mxu0 0
    %57 = vmatprep.subr.bf16.mxu0 0
    %58 = vmatpush1.bf16.msra.mxu0 0
    %59 = vmatprep.subr.bf16.mxu0 0
    %60 = vmatpush1.bf16.msra.mxu0 0
    %61 = vmatprep.subr.bf16.mxu0 0
    %62 = vmatpush1.bf16.msra.mxu0 0
    %63 = vmatprep.subr.bf16.mxu0 0
    %64 = vmatpush1.bf16.msra.mxu0 0
    %65 = vmatprep.subr.bf16.mxu0 0
    %66 = vmatpush1.bf16.msra.mxu0 0
    %67 = vmatprep.subr.bf16.mxu0 0
    %68 = vmatpush1.bf16.msra.mxu0 0
    %69 = vmatprep.subr.bf16.mxu0 0
    %70 = vmatpush1.bf16.msra.mxu0 0
    %71 = vmatprep.subr.bf16.mxu0 0
    %72 = vmatpush1.bf16.msra.mxu0 0
    %73 = vmatprep.subr.bf16.mxu0 0
    %74 = vmatpush1.bf16.msra.mxu0 0
    %75 = vmatprep.subr.bf16.mxu0 0
    %76 = vmatpush1.bf16.msra.mxu0 0
    %77 = vmatprep.subr.bf16.mxu0 0
    %78 = vmatpush1.bf16.msra.mxu0 0
    %79 = vmatprep.subr.bf16.mxu0 0
    %80 = vmatpush1.bf16.msra.mxu0 0
    %81 = vmatprep.subr.bf16.mxu0 0
    %82 = vmatpush1.bf16.msra.mxu0 0
    %83 = vmatprep.mubr.bf16.mxu0 0
    %84 = vmatmul.mubr.bf16.gmra.mrb[0].mxu0 %v45
    %v85 = vpop.f32.mrb[0].mxu0
    %v86 = vadd.f32 %v41, %v85
    %v87 = vpop.f32.mrb[0].mxu0
    %v88 = vpop.f32.mrb[0].mxu0
    %v89 = vpop.f32.mrb[0].mxu0
    %90 = vdwg.mxu0
    %v91 = vmax.f32 %v86, 0.0
    %v92 = vpack.c.bf16 %v91, %v91
    %v93 = vld [vmem:[#allocation2] sm:$0xf]
    %v94 = vld [vmem:[#allocation2 + $0x4] sm:$0xf]
    %v95 = vld [vmem:[#allocation2 + $0x8] sm:$0xf]
    %v96 = vld [vmem:[#allocation2 + $0xc] sm:$0xf]
    %v97 = vld [vmem:[#allocation2 + $0x10] sm:$0xf]
    %v98 = vld [vmem:[#allocation2 + $0x14] sm:$0xf]
    %v99 = vld [vmem:[#allocation2 + $0x18] sm:$0xf]
    %v100 = vld [vmem:[#allocation2 + $0x1c] sm:$0xf]
    %v101 = vld [vmem:[#allocation2 + $0x20] sm:$0xf]
    %v102 = vld [vmem:[#allocation2 + $0x24] sm:$0xf]
    %v103 = vld [vmem:[#allocation2 + $0x28] sm:$0xf]
    %v104 = vld [vmem:[#allocation2 + $0x2c] sm:$0xf]
    %v105 = vld [vmem:[#allocation2 + $0x30] sm:$0xf]
    %v106 = vld [vmem:[#allocation2 + $0x34] sm:$0xf]
    %v107 = vld [vmem:[#allocation2 + $0x38] sm:$0xf]
    %v108 = vld [vmem:[#allocation2 + $0x3c] sm:$0xf]
    %s109 = scalar_lea.vmem %s3, 1
    %v110 = vld [vmem:[%s109] sm:$0x1]
    %v112 = vlaneseq
    %v113 = vshrl.u32 %v112, 7
    %v114 = vsub.s32 0, %v113
    %v115 = vrot.slane %v110, %v114
    %v133 = vunpack.c.l.b16 %v93
    %v134 = vunpack.c.l.b16 %v94
    %v135 = vunpack.c.l.b16 %v95
    %v136 = vunpack.c.l.b16 %v96
    %v137 = vunpack.c.l.b16 %v97
    %v138 = vunpack.c.l.b16 %v98
    %v139 = vunpack.c.l.b16 %v99
    %v140 = vunpack.c.l.b16 %v100
    %v141 = vunpack.c.l.b16 %v101
    %v142 = vunpack.c.l.b16 %v102
    %v143 = vunpack.c.l.b16 %v103
    %v144 = vunpack.c.l.b16 %v104
    %v145 = vunpack.c.l.b16 %v105
    %v146 = vunpack.c.l.b16 %v106
    %v147 = vunpack.c.l.b16 %v107
    %v148 = vunpack.c.l.b16 %v108
    %v149 = vpack.c.b16 %v134, %v133
    %v150 = vpack.c.b16 %v136, %v135
    %v151 = vpack.c.b16 %v138, %v137
    %v152 = vpack.c.b16 %v140, %v139
    %v153 = vpack.c.b16 %v142, %v141
    %v154 = vpack.c.b16 %v144, %v143
    %v155 = vpack.c.b16 %v146, %v145
    %v156 = vpack.c.b16 %v148, %v147
    %165 = vmatprep.subr.bf16.mxu0 0
    %166 = vmatpush1.bf16.msra.mxu0 %v149
    %167 = vmatprep.subr.bf16.mxu0 0
    %168 = vmatpush1.bf16.msra.mxu0 %v150
    %169 = vmatprep.subr.bf16.mxu0 0
    %170 = vmatpush1.bf16.msra.mxu0 %v151
    %171 = vmatprep.subr.bf16.mxu0 0
    %172 = vmatpush1.bf16.msra.mxu0 %v152
    %173 = vmatprep.subr.bf16.mxu0 0
    %174 = vmatpush1.bf16.msra.mxu0 %v153
    %175 = vmatprep.subr.bf16.mxu0 0
    %176 = vmatpush1.bf16.msra.mxu0 %v154
    %177 = vmatprep.subr.bf16.mxu0 0
    %178 = vmatpush1.bf16.msra.mxu0 %v155
    %179 = vmatprep.subr.bf16.mxu0 0
    %180 = vmatpush1.bf16.msra.mxu0 %v156
    %181 = vmatprep.subr.bf16.mxu0 0
    %182 = vmatpush1.bf16.msra.mxu0 0
    %183 = vmatprep.subr.bf16.mxu0 0
    %184 = vmatpush1.bf16.msra.mxu0 0
    %185 = vmatprep.subr.bf16.mxu0 0
    %186 = vmatpush1.bf16.msra.mxu0 0
    %187 = vmatprep.subr.bf16.mxu0 0
    %188 = vmatpush1.bf16.msra.mxu0 0
    %189 = vmatprep.subr.bf16.mxu0 0
    %190 = vmatpush1.bf16.msra.mxu0 0
    %191 = vmatprep.subr.bf16.mxu0 0
    %192 = vmatpush1.bf16.msra.mxu0 0
    %193 = vmatprep.subr.bf16.mxu0 0
    %194 = vmatpush1.bf16.msra.mxu0 0
    %195 = vmatprep.subr.bf16.mxu0 0
    %196 = vmatpush1.bf16.msra.mxu0 0
    %197 = vmatprep.mubr.bf16.mxu0 0
    %198 = vmatmul.mubr.bf16.gmra.mrb[0].mxu0 %v92
    %v199 = vpop.f32.mrb[0].mxu0
    %v200 = vadd.f32 %v115, %v199
    %v201 = vpop.f32.mrb[0].mxu0
    %v202 = vpop.f32.mrb[0].mxu0
    %v203 = vpop.f32.mrb[0].mxu0
    %204 = vdwg.mxu0
    %v205 = vmax.f32 %v200, 0.0
    %v206 = vpack.c.bf16 %v205, %v205
    %s207 = scalar_lea.vmem [#allocation2], 64
    %v208 = vld [vmem:[%s207] sm:$0xf]
    %v209 = vld [vmem:[%s207 + $0x4] sm:$0xf]
    %v210 = vld [vmem:[%s207 + $0x8] sm:$0xf]
    %v211 = vld [vmem:[%s207 + $0xc] sm:$0xf]
    %v212 = vld [vmem:[%s207 + $0x10] sm:$0xf]
    %v213 = vld [vmem:[%s207 + $0x14] sm:$0xf]
    %v214 = vld [vmem:[%s207 + $0x18] sm:$0xf]
    %v215 = vld [vmem:[%s207 + $0x1c] sm:$0xf]
    %v216 = vld [vmem:[%s207 + $0x20] sm:$0xf]
    %v217 = vld [vmem:[%s207 + $0x24] sm:$0xf]
    %v218 = vld [vmem:[%s207 + $0x28] sm:$0xf]
    %v219 = vld [vmem:[%s207 + $0x2c] sm:$0xf]
    %v220 = vld [vmem:[%s207 + $0x30] sm:$0xf]
    %v221 = vld [vmem:[%s207 + $0x34] sm:$0xf]
    %v222 = vld [vmem:[%s207 + $0x38] sm:$0xf]
    %v223 = vld [vmem:[%s207 + $0x3c] sm:$0xf]
    %s224 = scalar_lea.vmem %s3, 2
    %v225 = vld [vmem:[%s224] sm:$0x1]
    %v227 = vlaneseq
    %v228 = vshrl.u32 %v227, 7
    %v229 = vsub.s32 0, %v228
    %v230 = vrot.slane %v225, %v229
    %v248 = vunpack.c.l.b16 %v208
    %v249 = vunpack.c.l.b16 %v209
    %v250 = vunpack.c.l.b16 %v210
    %v251 = vunpack.c.l.b16 %v211
    %v252 = vunpack.c.l.b16 %v212
    %v253 = vunpack.c.l.b16 %v213
    %v254 = vunpack.c.l.b16 %v214
    %v255 = vunpack.c.l.b16 %v215
    %v256 = vunpack.c.l.b16 %v216
    %v257 = vunpack.c.l.b16 %v217
    %v258 = vunpack.c.l.b16 %v218
    %v259 = vunpack.c.l.b16 %v219
    %v260 = vunpack.c.l.b16 %v220
    %v261 = vunpack.c.l.b16 %v221
    %v262 = vunpack.c.l.b16 %v222
    %v263 = vunpack.c.l.b16 %v223
    %v264 = vpack.c.b16 %v249, %v248
    %v265 = vpack.c.b16 %v251, %v250
    %v266 = vpack.c.b16 %v253, %v252
    %v267 = vpack.c.b16 %v255, %v254
    %v268 = vpack.c.b16 %v257, %v256
    %v269 = vpack.c.b16 %v259, %v258
    %v270 = vpack.c.b16 %v261, %v260
    %v271 = vpack.c.b16 %v263, %v262
    %280 = vmatprep.subr.bf16.mxu0 0
    %281 = vmatpush1.bf16.msra.mxu0 %v264
    %282 = vmatprep.subr.bf16.mxu0 0
    %283 = vmatpush1.bf16.msra.mxu0 %v265
    %284 = vmatprep.subr.bf16.mxu0 0
    %285 = vmatpush1.bf16.msra.mxu0 %v266
    %286 = vmatprep.subr.bf16.mxu0 0
    %287 = vmatpush1.bf16.msra.mxu0 %v267
    %288 = vmatprep.subr.bf16.mxu0 0
    %289 = vmatpush1.bf16.msra.mxu0 %v268
    %290 = vmatprep.subr.bf16.mxu0 0
    %291 = vmatpush1.bf16.msra.mxu0 %v269
    %292 = vmatprep.subr.bf16.mxu0 0
    %293 = vmatpush1.bf16.msra.mxu0 %v270
    %294 = vmatprep.subr.bf16.mxu0 0
    %295 = vmatpush1.bf16.msra.mxu0 %v271
    %296 = vmatprep.subr.bf16.mxu0 0
    %297 = vmatpush1.bf16.msra.mxu0 0
    %298 = vmatprep.subr.bf16.mxu0 0
    %299 = vmatpush1.bf16.msra.mxu0 0
    %300 = vmatprep.subr.bf16.mxu0 0
    %301 = vmatpush1.bf16.msra.mxu0 0
    %302 = vmatprep.subr.bf16.mxu0 0
    %303 = vmatpush1.bf16.msra.mxu0 0
    %304 = vmatprep.subr.bf16.mxu0 0
    %305 = vmatpush1.bf16.msra.mxu0 0
    %306 = vmatprep.subr.bf16.mxu0 0
    %307 = vmatpush1.bf16.msra.mxu0 0
    %308 = vmatprep.subr.bf16.mxu0 0
    %309 = vmatpush1.bf16.msra.mxu0 0
    %310 = vmatprep.subr.bf16.mxu0 0
    %311 = vmatpush1.bf16.msra.mxu0 0
    %312 = vmatprep.mubr.bf16.mxu0 0
    %313 = vmatmul.mubr.bf16.gmra.mrb[0].mxu0 %v206
    %v314 = vpop.f32.mrb[0].mxu0
    %v315 = vadd.f32 %v230, %v314
    %v316 = vpop.f32.mrb[0].mxu0
    %v317 = vpop.f32.mrb[0].mxu0
    %v318 = vpop.f32.mrb[0].mxu0
    %319 = vdwg.mxu0
    %v320 = vmax.f32 %v315, 0.0
    %v321 = vpack.c.bf16 %v320, %v320
    %s322 = scalar_lea.vmem [#allocation2], 128
    %v323 = vld [vmem:[%s322] sm:$0xf]
    %v324 = vld [vmem:[%s322 + $0x4] sm:$0xf]
    %v325 = vld [vmem:[%s322 + $0x8] sm:$0xf]
    %v326 = vld [vmem:[%s322 + $0xc] sm:$0xf]
    %v327 = vld [vmem:[%s322 + $0x10] sm:$0xf]
    %v328 = vld [vmem:[%s322 + $0x14] sm:$0xf]
    %v329 = vld [vmem:[%s322 + $0x18] sm:$0xf]
    %v330 = vld [vmem:[%s322 + $0x1c] sm:$0xf]
    %v331 = vld [vmem:[%s322 + $0x20] sm:$0xf]
    %v332 = vld [vmem:[%s322 + $0x24] sm:$0xf]
    %v333 = vld [vmem:[%s322 + $0x28] sm:$0xf]
    %v334 = vld [vmem:[%s322 + $0x2c] sm:$0xf]
    %v335 = vld [vmem:[%s322 + $0x30] sm:$0xf]
    %v336 = vld [vmem:[%s322 + $0x34] sm:$0xf]
    %v337 = vld [vmem:[%s322 + $0x38] sm:$0xf]
    %v338 = vld [vmem:[%s322 + $0x3c] sm:$0xf]
    %s339 = scalar_lea.vmem %s3, 3
    %v340 = vld [vmem:[%s339] sm:$0x1]
    %v342 = vlaneseq
    %v343 = vshrl.u32 %v342, 7
    %v344 = vsub.s32 0, %v343
    %v345 = vrot.slane %v340, %v344
    %v363 = vunpack.c.l.b16 %v323
    %v364 = vunpack.c.l.b16 %v324
    %v365 = vunpack.c.l.b16 %v325
    %v366 = vunpack.c.l.b16 %v326
    %v367 = vunpack.c.l.b16 %v327
    %v368 = vunpack.c.l.b16 %v328
    %v369 = vunpack.c.l.b16 %v329
    %v370 = vunpack.c.l.b16 %v330
    %v371 = vunpack.c.l.b16 %v331
    %v372 = vunpack.c.l.b16 %v332
    %v373 = vunpack.c.l.b16 %v333
    %v374 = vunpack.c.l.b16 %v334
    %v375 = vunpack.c.l.b16 %v335
    %v376 = vunpack.c.l.b16 %v336
    %v377 = vunpack.c.l.b16 %v337
    %v378 = vunpack.c.l.b16 %v338
    %v379 = vpack.c.b16 %v364, %v363
    %v380 = vpack.c.b16 %v366, %v365
    %v381 = vpack.c.b16 %v368, %v367
    %v382 = vpack.c.b16 %v370, %v369
    %v383 = vpack.c.b16 %v372, %v371
    %v384 = vpack.c.b16 %v374, %v373
    %v385 = vpack.c.b16 %v376, %v375
    %v386 = vpack.c.b16 %v378, %v377
    %395 = vmatprep.subr.bf16.mxu0 0
    %396 = vmatpush1.bf16.msra.mxu0 %v379
    %397 = vmatprep.subr.bf16.mxu0 0
    %398 = vmatpush1.bf16.msra.mxu0 %v380
    %399 = vmatprep.subr.bf16.mxu0 0
    %400 = vmatpush1.bf16.msra.mxu0 %v381
    %401 = vmatprep.subr.bf16.mxu0 0
    %402 = vmatpush1.bf16.msra.mxu0 %v382
    %403 = vmatprep.subr.bf16.mxu0 0
    %404 = vmatpush1.bf16.msra.mxu0 %v383
    %405 = vmatprep.subr.bf16.mxu0 0
    %406 = vmatpush1.bf16.msra.mxu0 %v384
    %407 = vmatprep.subr.bf16.mxu0 0
    %408 = vmatpush1.bf16.msra.mxu0 %v385
    %409 = vmatprep.subr.bf16.mxu0 0
    %410 = vmatpush1.bf16.msra.mxu0 %v386
    %411 = vmatprep.subr.bf16.mxu0 0
    %412 = vmatpush1.bf16.msra.mxu0 0
    %413 = vmatprep.subr.bf16.mxu0 0
    %414 = vmatpush1.bf16.msra.mxu0 0
    %415 = vmatprep.subr.bf16.mxu0 0
    %416 = vmatpush1.bf16.msra.mxu0 0
    %417 = vmatprep.subr.bf16.mxu0 0
    %418 = vmatpush1.bf16.msra.mxu0 0
    %419 = vmatprep.subr.bf16.mxu0 0
    %420 = vmatpush1.bf16.msra.mxu0 0
    %421 = vmatprep.subr.bf16.mxu0 0
    %422 = vmatpush1.bf16.msra.mxu0 0
    %423 = vmatprep.subr.bf16.mxu0 0
    %424 = vmatpush1.bf16.msra.mxu0 0
    %425 = vmatprep.subr.bf16.mxu0 0
    %426 = vmatpush1.bf16.msra.mxu0 0
    %427 = vmatprep.mubr.bf16.mxu0 0
    %428 = vmatmul.mubr.bf16.gmra.mrb[0].mxu0 %v321
    %v429 = vpop.f32.mrb[0].mxu0
    %v430 = vadd.f32 %v345, %v429
    %v431 = vpop.f32.mrb[0].mxu0
    %v432 = vpop.f32.mrb[0].mxu0
    %v433 = vpop.f32.mrb[0].mxu0
    %434 = vdwg.mxu0
    %435 = vst [vmem:[#allocation5] sm:$0xff] %v430
    // Predicated region
    $region22: #{tpu_custom_call.1} parent=1 // pred_check
      _
    $region23: #{tpu_custom_call.1} parent=1 // pred_check_branch
      %437 = sbr.rel (0) target = $region25
    $region24: #{tpu_custom_call.1} parent=1 // pred_region
      %s439 = ssub.s32 128, 128
      %440 = vsyncadd [#allocation4], %s439
      %s442 = sshll.u32 [#allocation5], 4
      %s443 = int_to_ptr.vmem [resolvable:$true] %s442
      %445 = dma.vmem_to_hbm [thread:$0]  %s443, 128, %s4, [#allocation4]
    $region25: #{tpu_custom_call.1} parent=1 // pred_fallthru
      _
    // Predicated region
    $region26: #{tpu_custom_call.1} parent=1 // pred_check
      _
    $region27: #{tpu_custom_call.1} parent=1 // pred_check_branch
      %447 = sbr.rel (0) target = $region29
    $region28: #{tpu_custom_call.1} parent=1 // pred_region
      %448 = dma.done [#allocation4], 128
    $region29: #{tpu_custom_call.1} parent=1 // pred_fallthru
      _
    %449 = vsyncpa [#allocation3], 1
    %450 = vsyncpa [#allocation4], 1

</llo_original>
